<compile_context>
chip_gen: v6e
topology: v6e:2x2x1
jax: 0.10.0
libtpu: 0.0.40
codegen_flags: <defaults>
</compile_context>

<pallas_src>
import functools

import jax
import jax.numpy as jnp
from jax.experimental import pallas as pl
from jax.experimental.pallas import tpu as pltpu


def _shape_text_kernel(feat_ref, w_ref, out_ref, *, part_axis):
    # feat_ref: (Bp, F+1) resident (includes ones column driving the bias row)
    # w_ref:    (1, F+1, TN) streamed weight tile (bias folded as last row)
    # out_ref:  (1, Bp, TN)
    w = w_ref[0]
    y = jnp.dot(feat_ref[...].astype(w.dtype), w,
                preferred_element_type=jnp.float32)        # f32 MXU accumulation

    part = pl.program_id(part_axis)                        # 0 = verts, 1 = texture

    @pl.when(part == 0)
    def _():
        out_ref[0] = y.astype(out_ref.dtype)

    @pl.when(part == 1)
    def _():
        out_ref[0] = jax.nn.sigmoid(y).astype(out_ref.dtype)


def prepare_params(weight, bias, num_vert, *, param_dtype=jnp.float32):
    """One-time re-layout of nn.Linear params (do this at init, not per call).

    weight: (num_vert*6, F) torch layout; bias: (num_vert*6,)
    Returns wb_perm of shape (2, F+1, NV3p):
      part 0 = xyz columns, part 1 = rgb columns (vertex-major),
      row F = bias (driven by a ones column appended to feat),
      columns zero-padded up to NV3p = round_up(num_vert*3, 128) so stores are
      always full 128-lane multiples.
    """
    NV6, F = weight.shape
    assert NV6 == num_vert * 6
    NV3 = num_vert * 3
    NV3p = ((NV3 + 127) // 128) * 128

    w3 = weight.reshape(num_vert, 6, F)
    b3 = bias.reshape(num_vert, 6)

    def make_part(w_half, b_half):
        w = w_half.reshape(NV3, F).T                  # (F, NV3) lane-dense
        b = b_half.reshape(1, NV3)                    # (1, NV3) bias row
        wb = jnp.concatenate([w, b], axis=0)          # (F+1, NV3)
        return jnp.pad(wb, ((0, 0), (0, NV3p - NV3)))

    wb_perm = jnp.stack(
        [make_part(w3[:, :3, :], b3[:, :3]),
         make_part(w3[:, 3:, :], b3[:, 3:])], axis=0)  # (2, F+1, NV3p)
    return wb_perm.astype(param_dtype)


def shape_text_predictor(feat, wb_perm, num_vert, *,
                         vmem_budget_bytes=24 * 1024 * 1024,
                         vmem_limit_bytes=32 * 1024 * 1024,
                         lane_dense_output=False):
    """feat: (B, F); wb_perm: (2, F+1, NV3p) from prepare_params."""
    B, F = feat.shape
    NV3 = num_vert * 3
    two, F1, NV3p = wb_perm.shape
    assert two == 2 and F1 == F + 1 and NV3p >= NV3 and NV3p % 128 == 0

    # Pad batch to the 8-sublane minimum; append ones column for the bias row.
    Bp = ((B + 7) // 8) * 8
    feat_p = feat if Bp == B else jnp.pad(feat, ((0, Bp - B), (0, 0)))
    feat_p = jnp.concatenate(
        [feat_p, jnp.ones((Bp, 1), dtype=feat.dtype)], axis=1)      # (Bp, F+1)

    out_itemsize = jnp.dtype(feat.dtype).itemsize
    w_itemsize = jnp.dtype(wb_perm.dtype).itemsize

    # Budget-derived lane tile: per step we double-buffer a (F+1, TN) weight
    # tile and a (Bp, TN) output tile; feat stays resident.
    budget = max(vmem_budget_bytes - 2 * Bp * F1 * out_itemsize, 1 << 20)
    bytes_per_col = 2 * (F1 * w_itemsize + Bp * out_itemsize)
    tn_max = max(128, (budget // bytes_per_col) // 128 * 128)

    if NV3p <= tn_max:
        TN = NV3p                                   # single full-width tile
    else:
        # Prefer a 128-multiple TN that exactly divides NV3p (no masked last
        # tile); fall back to tn_max if the best exact divisor is far too small.
        m, best = NV3p // 128, 128
        for d in range(tn_max // 128, 0, -1):
            if m % d == 0:
                best = d * 128
                break
        TN = best if best * 4 >= tn_max else tn_max
    grid_cols = pl.cdiv(NV3p, TN)

    # Put the larger extent first so megacore sharding (v7x) splits the bigger
    # axis; both axes are independent -> "parallel".
    if grid_cols >= 2:
        grid = (grid_cols, 2)
        part_axis = 1
        feat_map = lambda j, p: (0, 0)
        w_map = lambda j, p: (p, 0, j)
        out_map = lambda j, p: (p, 0, j)
    else:
        grid = (2, grid_cols)
        part_axis = 0
        feat_map = lambda p, j: (0, 0)
        w_map = lambda p, j: (p, 0, j)
        out_map = lambda p, j: (p, 0, j)

    out = pl.pallas_call(
        functools.partial(_shape_text_kernel, part_axis=part_axis),
        out_shape=jax.ShapeDtypeStruct((2, Bp, NV3p), feat.dtype),
        grid=grid,
        in_specs=[
            pl.BlockSpec((Bp, F1), feat_map),        # feat: resident, tiny
            pl.BlockSpec((1, F1, TN), w_map),        # weight tile (streamed)
        ],
        out_specs=pl.BlockSpec((1, Bp, TN), out_map),
        compiler_params=pltpu.CompilerParams(
            dimension_semantics=("parallel", "parallel"),
            vmem_limit_bytes=vmem_limit_bytes),      # v5e default is only 16 MiB
        cost_estimate=pl.CostEstimate(
            flops=2 * Bp * F1 * NV3p * 2,            # 2 parts
            transcendentals=Bp * NV3p,               # sigmoid on texture part
            bytes_accessed=(Bp * F1 * out_itemsize
                            + 2 * F1 * NV3p * w_itemsize
                            + 2 * Bp * NV3p * out_itemsize)),
    )(feat_p, wb_perm)

    verts_flat = out[0, :B, :NV3]                    # strip batch + column padding
    tex_flat = out[1, :B, :NV3]
    if lane_dense_output:
        # Lane-dense (B, num_vert*3) slabs (vertex-major xyz / rgb): avoids the
        # lane-sparse relayout to a last dim of 3 when consumers allow it.
        return verts_flat, tex_flat
    return (verts_flat.reshape(B, num_vert, 3),
            tex_flat.reshape(B, num_vert, 3))


def _reference(feat, weight, bias, num_vert):
    delta_v = feat @ weight.T + bias
    delta_v = delta_v.reshape(feat.shape[0], -1, 6)
    verts = delta_v[:, :, :3]
    texture = jax.nn.sigmoid(delta_v[:, :, 3:])
    return verts, texture


if __name__ == "__main__":
    B = 2
    num_feat = 32
    num_vert = 16

    key = jax.random.PRNGKey(0)
    k_feat, k_w, k_b = jax.random.split(key, 3)

    feat = jax.random.normal(k_feat, (B, num_feat), dtype=jnp.float32)

    # Deterministic init mimicking nn.Linear defaults: U(-1/sqrt(fan_in), 1/sqrt(fan_in))
    bound = 1.0 / jnp.sqrt(jnp.float32(num_feat))
    weight = jax.random.uniform(
        k_w, (num_vert * 6, num_feat), minval=-bound, maxval=bound, dtype=jnp.float32)
    bias = jax.random.uniform(
        k_b, (num_vert * 6,), minval=-bound, maxval=bound, dtype=jnp.float32)

    verts_ref, tex_ref = _reference(feat, weight, bias, num_vert)

    # --- f32 parameter path: bit-faithful to the PyTorch forward -------------
    wb_f32 = prepare_params(weight, bias, num_vert, param_dtype=jnp.float32)
    verts, texture = shape_text_predictor(feat, wb_f32, num_vert)
    jax.block_until_ready((verts, texture))
    assert verts.shape == (B, num_vert, 3) and texture.shape == (B, num_vert, 3)
    assert jnp.allclose(verts, verts_ref, atol=1e-5, rtol=1e-5)
    assert jnp.allclose(texture, tex_ref, atol=1e-5, rtol=1e-5)

    # --- bf16 parameter path: halves the dominant weight HBM stream ----------
    # (MXU accumulates in f32; tolerance loosened for bf16 weight rounding.)
    wb_bf16 = prepare_params(weight, bias, num_vert, param_dtype=jnp.bfloat16)
    verts_b, texture_b = shape_text_predictor(feat, wb_bf16, num_vert)
    jax.block_until_ready((verts_b, texture_b))
    assert jnp.allclose(verts_b, verts_ref, atol=2e-2, rtol=2e-2)
    assert jnp.allclose(texture_b, tex_ref, atol=2e-2, rtol=2e-2)

    print("KERNEL_OK")
</pallas_src>

<mosaic_0001>
module attributes {stable_mosaic.version = 11 : i64} {
  func.func @_shape_text_kernel(%arg0: i32, %arg1: i32, %arg2: memref<8x33xf32, #tpu.memory_space<vmem>>, %arg3: memref<1x33x128xf32, #tpu.memory_space<vmem>>, %arg4: memref<1x8x128xf32, #tpu.memory_space<vmem>>) attributes {dimension_semantics = [#tpu.dimension_semantics<parallel>, #tpu.dimension_semantics<parallel>], iteration_bounds = array<i64: 2, 1>, scalar_prefetch = 0 : i64, scratch_operands = 0 : i64, tpu.core_type = #tpu.core_type<tc>, window_params = [{pipeline_mode = #tpu.pipeline_mode<synchronous>, transform_indices = @transform_0, window_bounds = array<i64: 8, 33>}, {transform_indices = @transform_1, window_bounds = array<i64: 1, 33, 128>}, {transform_indices = @transform_2, window_bounds = array<i64: 1, 8, 128>}]} {
    %c0 = arith.constant 0 : index
    %c0_0 = arith.constant 0 : index
    %c0_1 = arith.constant 0 : index
    %0 = vector.load %arg3[%c0, %c0_0, %c0_1] : memref<1x33x128xf32, #tpu.memory_space<vmem>>, vector<1x33x128xf32>
    %1 = vector.shape_cast %0 : vector<1x33x128xf32> to vector<33x128xf32>
    %c0_2 = arith.constant 0 : index
    %c0_3 = arith.constant 0 : index
    %2 = vector.load %arg2[%c0_2, %c0_3] : memref<8x33xf32, #tpu.memory_space<vmem>>, vector<8x33xf32>
    %cst = arith.constant dense<0.000000e+00> : vector<8x128xf32>
    %3 = tpu.matmul %2, %1, %cst {dimension_numbers = #tpu.dot_dimension_numbers<[1], [0], [0], [1], [0, 0, 1, 1], [], []>} : vector<8x33xf32>, vector<33x128xf32>, vector<8x128xf32> -> vector<8x128xf32>
    %c0_i32 = arith.constant 0 : i32
    %4 = arith.cmpi eq, %arg0, %c0_i32 : i32
    %5 = arith.extui %4 : i1 to i32
    %c0_i32_4 = arith.constant 0 : i32
    %6 = arith.cmpi ne, %5, %c0_i32_4 : i32
    scf.if %6 {
      %c0_6 = arith.constant 0 : index
      %c0_7 = arith.constant 0 : index
      %c0_8 = arith.constant 0 : index
      %10 = vector.load %arg4[%c0_6, %c0_7, %c0_8] : memref<1x8x128xf32, #tpu.memory_space<vmem>>, vector<1x8x128xf32>
      %11 = vector.shape_cast %10 : vector<1x8x128xf32> to vector<8x128xf32>
      %12 = vector.shape_cast %3 : vector<8x128xf32> to vector<1x8x128xf32>
      tpu.vector_store %arg4[%c0_6, %c0_7, %c0_8], %12 {strides = array<i32>} : memref<1x8x128xf32, #tpu.memory_space<vmem>>, vector<1x8x128xf32>,
    } else {
    }
    %c1_i32 = arith.constant 1 : i32
    %7 = arith.cmpi eq, %arg0, %c1_i32 : i32
    %8 = arith.extui %7 : i1 to i32
    %c0_i32_5 = arith.constant 0 : i32
    %9 = arith.cmpi ne, %8, %c0_i32_5 : i32
    scf.if %9 {
      %10 = arith.negf %3 : vector<8x128xf32>
      %11 = math.exp %10 : vector<8x128xf32>
      %cst_6 = arith.constant 1.000000e+00 : f32
      %12 = vector.broadcast %cst_6 : f32 to vector<8x128xf32>
      %13 = arith.addf %12, %11 : vector<8x128xf32>
      %14 = arith.divf %12, %13 : vector<8x128xf32>
      %c0_7 = arith.constant 0 : index
      %c0_8 = arith.constant 0 : index
      %c0_9 = arith.constant 0 : index
      %15 = vector.load %arg4[%c0_7, %c0_8, %c0_9] : memref<1x8x128xf32, #tpu.memory_space<vmem>>, vector<1x8x128xf32>
      %16 = vector.shape_cast %15 : vector<1x8x128xf32> to vector<8x128xf32>
      %17 = vector.shape_cast %14 : vector<8x128xf32> to vector<1x8x128xf32>
      tpu.vector_store %arg4[%c0_7, %c0_8, %c0_9], %17 {strides = array<i32>} : memref<1x8x128xf32, #tpu.memory_space<vmem>>, vector<1x8x128xf32>,
    } else {
    }
    return
  }
  func.func @transform_0(%arg0: i32, %arg1: i32) -> (i32, i32) {
    %c0_i32 = arith.constant 0 : i32
    %c0_i32_0 = arith.constant 0 : i32
    %c0_i32_1 = arith.constant 0 : i32
    return %c0_i32, %c0_i32_0 : i32, i32
  }
  func.func @transform_1(%arg0: i32, %arg1: i32) -> (i32, i32, i32) {
    %c0_i32 = arith.constant 0 : i32
    %c0_i32_0 = arith.constant 0 : i32
    return %arg0, %c0_i32, %arg1 : i32, i32, i32
  }
  func.func @transform_2(%arg0: i32, %arg1: i32) -> (i32, i32, i32) {
    %c0_i32 = arith.constant 0 : i32
    %c0_i32_0 = arith.constant 0 : i32
    return %arg0, %c0_i32, %arg1 : i32, i32, i32
  }
}

</mosaic_0001>

<llo_original>
// kernel: tpu_custom_call.1
$region0: #{tpu_custom_call.1}
  #allocation0 [shape = 'u32[]', space=smem, size = 0x4, offset = 0x4, fixed_abs, tag = 'smem constant byte address 0x4 - core index']
  #allocation1 [shape = 'u32[144,128]{1,0:T(1,128)}', space=vmem, size = 0x12000, scoped, tag = 'internal scratch']
  %s0 = inlined_call_operand.vmem [shape: f32[8,33], index: 0, kind: input, shape index: {}]
  %s1 = inlined_call_operand.vmem [shape: f32[2,33,128], index: 1, kind: input, shape index: {}]
  %s2 = inlined_call_operand.hbm [shape: f32[2,8,128], index: 2, kind: output, shape index: {}]
  %s3 = sld [smem:[#allocation0]]
  $region49: #{tpu_custom_call.1} parent=0
    _
  %s5 = ssub.s32 1, %s3
  %s6 = scalar_select 0, %s5, %s3
  $region1: #{tpu_custom_call.1} parent=0
    #allocation2 [shape = 'u8[8192]{0}', space=vmem, size = 0x2000, scoped, tag = 'output window, operand 0']
    #allocation3 [shape = 's32[2]{0}', space=sflag, size = 0x8, scoped, tag = 'scoped memory for tpu_custom_call.1']
    %7 = vsyncpa [#allocation3], 0
    %s8 = scalar_lea.sflag [#allocation3], 1
    %9 = vsyncpa %s8, 0
    loop: start=0, step=1, limit=4
    $region2: #{tpu_custom_call.1} parent=1 // loop_pre_header
      _
    $region3: #{tpu_custom_call.1} parent=1 // loop_header
      %s11 = sphi 0, %s15
      %p12 = scmp.ge.s32.totalorder %s11, 4
      %s18 = sphi 0, %s30
      %s19 = sphi 0, %s26
      %s20 = sphi 0, %s18
      %s21 = sphi 0, %s19
      %s22 = sphi 0, %s20
      %s23 = sphi 0, %s21
      %s31 = sphi 0, %s31
      %s33 = sphi 0, %s31
      %s34 = sphi 0, %s33
      %s48 = sphi 0, %s34
      %s56 = sphi 0, %s58
      %s59 = sphi 0, %s56
      %s60 = sphi 0, %s59
      %s76 = sphi 0, %s60
      %s84 = sphi 0, %s86
      %s87 = sphi 0, %s84
      %s88 = sphi 0, %s87
      %s104 = sphi 0, %s88
    $region4: #{tpu_custom_call.1} parent=1 // loop_header_branch
      %14 = sbr.rel (%p12) target = $region8
    $region5: #{tpu_custom_call.1} parent=1 // loop_body
      %s16 = ssub.s32 %s11, 1
      %s17 = ssub.s32 %s11, 2
      %s24 = sadd.s32 1, %s19
      %p25 = scmp.ge.s32.totalorder %s24, 1
      %s26 = scalar_select %p25, 0, %s24
      %s27 = sadd.s32 1, %s18
      %s28 = scalar_select %p25, %s27, %s18
      %p29 = scmp.ge.s32.totalorder %s28, 2
      %s30 = scalar_select %p29, 0, %s28
      %s32 = sadd.s32 %s31, 1
      %p35 = scmp.eq.s32.totalorder %s11, 1
      %p36 = scmp.ne.s32.totalorder %s31, %s33
      %p37 = scmp.eq.s32.totalorder %s11, 0
      %p38 = por %p36, %p37
      %p39 = scmp.ne.s32.totalorder %s31, %s33
      %p40 = scmp.eq.s32.totalorder %s16, 1
      %p41 = por %p39, %p40
      %p42 = scmp.ne.s32.totalorder %s33, %s34
      %p43 = scmp.eq.s32.totalorder %s16, 0
      %p44 = por %p42, %p43
      %p45 = scmp.ne.s32.totalorder %s33, %s34
      %p46 = scmp.eq.s32.totalorder %s17, 1
      %p47 = por %p45, %p46
      %p49 = scmp.ne.s32.totalorder %s34, %s48
      %p50 = scmp.eq.s32.totalorder %s17, 0
      %p51 = por %p49, %p50
      %s52 = ssub.s32 %s18, %s30
      %s53 = ssub.s32 %s19, %s26
      %s54 = sor.u32 %s52, %s53
      %p55 = scmp.eq.s32.totalorder %s54, 0
      %s57 = sadd.s32 %s56, 1
      %s58 = scalar_select %p55, %s56, %s57
      %p61 = pneg %p55
      %p62 = scmp.eq.s32.totalorder %s11, 1
      %p63 = por %p61, %p62
      %p64 = scmp.ne.s32.totalorder %s56, %s59
      %p65 = scmp.eq.s32.totalorder %s11, 0
      %p66 = por %p64, %p65
      %p67 = scmp.ne.s32.totalorder %s56, %s59
      %p68 = scmp.eq.s32.totalorder %s16, 1
      %p69 = por %p67, %p68
      %p70 = scmp.ne.s32.totalorder %s59, %s60
      %p71 = scmp.eq.s32.totalorder %s16, 0
      %p72 = por %p70, %p71
      %p73 = scmp.ne.s32.totalorder %s59, %s60
      %p74 = scmp.eq.s32.totalorder %s17, 1
      %p75 = por %p73, %p74
      %p77 = scmp.ne.s32.totalorder %s60, %s76
      %p78 = scmp.eq.s32.totalorder %s17, 0
      %p79 = por %p77, %p78
      %s80 = ssub.s32 %s18, %s30
      %s81 = ssub.s32 %s19, %s26
      %s82 = sor.u32 %s80, %s81
      %p83 = scmp.eq.s32.totalorder %s82, 0
      %s85 = sadd.s32 %s84, 1
      %s86 = scalar_select %p83, %s84, %s85
      %p89 = pneg %p83
      %p90 = scmp.eq.s32.totalorder %s11, 1
      %p91 = por %p89, %p90
      %p92 = scmp.ne.s32.totalorder %s84, %s87
      %p93 = scmp.eq.s32.totalorder %s11, 0
      %p94 = por %p92, %p93
      %p95 = scmp.ne.s32.totalorder %s84, %s87
      %p96 = scmp.eq.s32.totalorder %s16, 1
      %p97 = por %p95, %p96
      %p98 = scmp.ne.s32.totalorder %s87, %s88
      %p99 = scmp.eq.s32.totalorder %s16, 0
      %p100 = por %p98, %p99
      %p101 = scmp.ne.s32.totalorder %s87, %s88
      %p102 = scmp.eq.s32.totalorder %s17, 1
      %p103 = por %p101, %p102
      %p105 = scmp.ne.s32.totalorder %s88, %s104
      %p106 = scmp.eq.s32.totalorder %s17, 0
      %p107 = por %p105, %p106
      %p108 = scmp.le.s32.totalorder 1, %s11
      %p109 = scmp.lt.s32.totalorder %s11, 3
      %p110 = pnand %p108, %p109
      %p111 = pneg %p110
      // Predicated region
      $region9: #{tpu_custom_call.1} parent=5 // pred_check
        _
      $region10: #{tpu_custom_call.1} parent=5 // pred_check_branch
        %113 = sbr.rel (%p110) target = $region12
      $region11: #{tpu_custom_call.1} parent=5 // pred_region
        %s114 = ssub.s32 %s11, 1
        // Predicated region
        $region13: #{tpu_custom_call.1} parent=11 // pred_check
          %p115 = pneg %p44
        $region14: #{tpu_custom_call.1} parent=11 // pred_check_branch
          %117 = sbr.rel (%p115) target = $region16
        $region15: #{tpu_custom_call.1} parent=11 // pred_region
          _
        $region16: #{tpu_custom_call.1} parent=11 // pred_fallthru
          _
      $region12: #{tpu_custom_call.1} parent=5 // pred_fallthru
        _
      %p118 = scmp.lt.s32.totalorder %s11, 2
      // Predicated region
      $region17: #{tpu_custom_call.1} parent=5 // pred_check
        %p119 = pneg %p118
      $region18: #{tpu_custom_call.1} parent=5 // pred_check_branch
        %121 = sbr.rel (%p119) target = $region20
      $region19: #{tpu_custom_call.1} parent=5 // pred_region
        // Predicated region
        $region21: #{tpu_custom_call.1} parent=19 // pred_check
          %p122 = pneg %p66
        $region22: #{tpu_custom_call.1} parent=19 // pred_check_branch
          %124 = sbr.rel (%p122) target = $region24
        $region23: #{tpu_custom_call.1} parent=19 // pred_region
          %p125 = scmp.lt.s32.totalorder %s18, 1
          %s126 = scalar_select %p125, %s18, 1
          %p127 = scmp.lt.s32.totalorder %s19, 0
          %s128 = scalar_select %p127, %s19, 0
          %s129 = smul.addr %s126, 5
          %s130 = sadd.s32 %s128, %s129
          %s131 = smul.addr %s130, 8
          %s132 = scalar_lea.vmem %s1, %s131
        $region24: #{tpu_custom_call.1} parent=19 // pred_fallthru
          _
      $region20: #{tpu_custom_call.1} parent=5 // pred_fallthru
        _
      %p133 = scmp.le.s32.totalorder 1, %s11
      %p134 = scmp.lt.s32.totalorder %s11, 3
      %p135 = pnand %p133, %p134
      %p136 = pneg %p135
      // Predicated region
      $region25: #{tpu_custom_call.1} parent=5 // pred_check
        _
      $region26: #{tpu_custom_call.1} parent=5 // pred_check_branch
        %138 = sbr.rel (%p135) target = $region28
      $region27: #{tpu_custom_call.1} parent=5 // pred_region
        %s139 = ssub.s32 %s11, 1
        %p140 = pneg %p44
        %p141 = pneg %p41
        %p142 = scmp.lt.s32.totalorder %s20, 1
        %s143 = scalar_select %p142, %s20, 1
        %p144 = scmp.lt.s32.totalorder %s21, 0
        %s145 = scalar_select %p144, %s21, 0
        %s146 = smul.addr %s143, 5
        %s147 = sadd.s32 %s145, %s146
        %s148 = smul.addr %s147, 8
        %s149 = scalar_lea.vmem %s1, %s148
        %p150 = pneg %p72
        %p151 = pneg %p69
        %p152 = pneg %p100
        %p153 = pneg %p97
        %s154 = sand.u32 %s87, 1
        %s155 = scalar_lea.sflag [#allocation3], %s154
        %s156 = sand.u32 %s87, 1
        %s157 = smul.addr %s156, 8
        %s158 = scalar_lea.vmem [#allocation2], %s157
        %p159 = scmp.lt.s32.totalorder %s20, 1
        %s160 = scalar_select %p159, %s20, 1
        %p161 = scmp.lt.s32.totalorder %s21, 0
        %s162 = scalar_select %p161, %s21, 0
        %s163 = smul.addr %s160, 5
        %s164 = sadd.s32 %s162, %s163
        %s165 = smul.addr %s164, 8
        %s166 = scalar_lea.vmem %s1, %s165
        %v167 = vld [vmem:[%s166] sm:$0xff]
        %v168 = vld [vmem:[%s166 + $0x8] sm:$0xff]
        %v169 = vld [vmem:[%s166 + $0x10] sm:$0xff]
        %v170 = vld [vmem:[%s166 + $0x18] sm:$0xff]
        %v171 = vld [vmem:[%s166 + $0x20] sm:$0x1]
        %v172 = vld [vmem:[%s0] sm:$0xff]
        %vm173 = vcmask 269312
        %v175 = vsel %vm173, %v172, 0
        %vm177 = vcmask 1040384
        %v179 = vsel %vm177, %v171, 0
        %181 = vmatprep.subr.mxu0 0.0
        %182 = vmatpush1.msra.mxu0 0.0
        %183 = vmatprep.subr.mxu0 0.0
        %184 = vmatpush1.msra.mxu0 0.0
        %185 = vmatprep.subr.mxu0 0.0
        %186 = vmatpush1.msra.mxu0 0.0
        %187 = vmatprep.subr.mxu0 0.0
        %188 = vmatpush1.msra.mxu0 0.0
        %189 = vmatprep.subr.mxu0 0.0
        %190 = vmatpush1.msra.mxu0 0.0
        %191 = vmatprep.subr.mxu0 0.0
        %192 = vmatpush1.msra.mxu0 0.0
        %193 = vmatprep.subr.mxu0 0.0
        %194 = vmatpush1.msra.mxu0 0.0
        %195 = vmatprep.subr.mxu0 0.0
        %196 = vmatpush1.msra.mxu0 0.0
        %197 = vmatprep.subr.mxu0 0.0
        %198 = vmatpush1.msra.mxu0 0.0
        %199 = vmatprep.subr.mxu0 0.0
        %200 = vmatpush1.msra.mxu0 0.0
        %201 = vmatprep.subr.mxu0 0.0
        %202 = vmatpush1.msra.mxu0 0.0
        %203 = vmatprep.subr.mxu0 0.0
        %204 = vmatpush1.msra.mxu0 %v179
        %205 = vmatprep.subr.mxu0 0.0
        %206 = vmatpush1.msra.mxu0 %v170
        %207 = vmatprep.subr.mxu0 0.0
        %208 = vmatpush1.msra.mxu0 %v169
        %209 = vmatprep.subr.mxu0 0.0
        %210 = vmatpush1.msra.mxu0 %v168
        %211 = vmatprep.subr.mxu0 0.0
        %212 = vmatpush1.msra.mxu0 %v167
        %213 = vmatprep.subr.mxu0 0.0
        %214 = vmatpush2.msra.mxu0 0.0
        %215 = vmatprep.subr.mxu0 0.0
        %216 = vmatpush2.msra.mxu0 0.0
        %217 = vmatprep.subr.mxu0 0.0
        %218 = vmatpush2.msra.mxu0 0.0
        %219 = vmatprep.subr.mxu0 0.0
        %220 = vmatpush2.msra.mxu0 0.0
        %221 = vmatprep.subr.mxu0 0.0
        %222 = vmatpush2.msra.mxu0 0.0
        %223 = vmatprep.subr.mxu0 0.0
        %224 = vmatpush2.msra.mxu0 0.0
        %225 = vmatprep.subr.mxu0 0.0
        %226 = vmatpush2.msra.mxu0 0.0
        %227 = vmatprep.subr.mxu0 0.0
        %228 = vmatpush2.msra.mxu0 0.0
        %229 = vmatprep.subr.mxu0 0.0
        %230 = vmatpush2.msra.mxu0 0.0
        %231 = vmatprep.subr.mxu0 0.0
        %232 = vmatpush2.msra.mxu0 0.0
        %233 = vmatprep.subr.mxu0 0.0
        %234 = vmatpush2.msra.mxu0 0.0
        %235 = vmatprep.subr.mxu0 0.0
        %236 = vmatpush2.msra.mxu0 0.0
        %237 = vmatprep.subr.mxu0 0.0
        %238 = vmatpush2.msra.mxu0 0.0
        %239 = vmatprep.subr.mxu0 0.0
        %240 = vmatpush2.msra.mxu0 0.0
        %241 = vmatprep.subr.mxu0 0.0
        %242 = vmatpush2.msra.mxu0 0.0
        %243 = vmatprep.subr.mxu0 0.0
        %244 = vmatpush2.msra.mxu0 0.0
        %245 = vmatprep.mubr.f32.mxu0 0.0
        %246 = vmatmul.mubr.f32.gmra.mxu0 %v175
        %v247 = vpop.f32.mrf.mxu0
        %v248 = vadd.f32 0.0, %v247
        %v249 = vpop.f32.mrf.mxu0
        %250 = vdwg.mxu0
        %p251 = scmp.eq.s32.totalorder %s20, 0
        // Predicated region
        $region29: #{tpu_custom_call.1} parent=27 // pred_check
          %p252 = pneg %p251
        $region30: #{tpu_custom_call.1} parent=27 // pred_check_branch
          %254 = sbr.rel (%p252) target = $region32
        $region31: #{tpu_custom_call.1} parent=27 // pred_region
          %255 = vst [vmem:[%s158] sm:$0xff] %v248
        $region32: #{tpu_custom_call.1} parent=27 // pred_fallthru
          _
        %p256 = scmp.eq.s32.totalorder %s20, 1
        // Predicated region
        $region33: #{tpu_custom_call.1} parent=27 // pred_check
          %p257 = pneg %p256
        $region34: #{tpu_custom_call.1} parent=27 // pred_check_branch
          %259 = sbr.rel (%p257) target = $region36
        $region35: #{tpu_custom_call.1} parent=27 // pred_region
          %v260 = vxor.u32 %v248, 2147483648
          %v261 = vmul.f32 %v260, 1.442695
          %v262 = vpow.pop %v261
          %v263 = vadd.f32 %v262, 1.0
          %v264 = vrcp.pop %v263
          %v265 = vmul.f32 1.0, %v264
          %266 = vst [vmem:[%s158] sm:$0xff] %v265
        $region36: #{tpu_custom_call.1} parent=27 // pred_fallthru
          _
        %s267 = sand.u32 %s87, 1
        %s268 = scalar_lea.sflag [#allocation3], %s267
        %s269 = sand.u32 %s87, 1
        %s270 = smul.addr %s269, 8
        %s271 = scalar_lea.vmem [#allocation2], %s270
        // Predicated region
        $region37: #{tpu_custom_call.1} parent=27 // pred_check
          %p272 = pneg %p97
        $region38: #{tpu_custom_call.1} parent=27 // pred_check_branch
          %274 = sbr.rel (%p272) target = $region40
        $region39: #{tpu_custom_call.1} parent=27 // pred_region
          %s276 = ssub.s32 128, 128
          %277 = vsyncadd %s268, %s276
          %s278 = sadd.s32 %s21, %s20
          %s279 = smul.addr %s278, 128
          %s280 = scalar_lea.hbm %s2, %s279
          %s282 = sshll.u32 %s271, 4
          %s283 = int_to_ptr.vmem [resolvable:$true] %s282
          %285 = dma.vmem_to_hbm [thread:$0]  %s283, 128, %s280, %s268
        $region40: #{tpu_custom_call.1} parent=27 // pred_fallthru
          _
      $region28: #{tpu_custom_call.1} parent=5 // pred_fallthru
        _
      %p286 = scmp.le.s32.totalorder 2, %s11
      // Predicated region
      $region41: #{tpu_custom_call.1} parent=5 // pred_check
        %p287 = pneg %p286
      $region42: #{tpu_custom_call.1} parent=5 // pred_check_branch
        %289 = sbr.rel (%p287) target = $region44
      $region43: #{tpu_custom_call.1} parent=5 // pred_region
        %s290 = ssub.s32 %s11, 2
        // Predicated region
        $region45: #{tpu_custom_call.1} parent=43 // pred_check
          %p291 = pneg %p103
        $region46: #{tpu_custom_call.1} parent=43 // pred_check_branch
          %293 = sbr.rel (%p291) target = $region48
        $region47: #{tpu_custom_call.1} parent=43 // pred_region
          %s294 = sand.u32 %s88, 1
          %s295 = scalar_lea.sflag [#allocation3], %s294
          %s296 = sand.u32 %s88, 1
          %s297 = smul.addr %s296, 8
          %s298 = scalar_lea.vmem [#allocation2], %s297
          %299 = dma.done %s295, 128
        $region48: #{tpu_custom_call.1} parent=43 // pred_fallthru
          _
      $region44: #{tpu_custom_call.1} parent=5 // pred_fallthru
        _
    $region6: #{tpu_custom_call.1} parent=1 // loop_footer
      %s15 = sadd.s32 1, %s11
    $region7: #{tpu_custom_call.1} parent=1 // loop_footer_branch
      %10 = sbr.rel target = $region3
    $region8: #{tpu_custom_call.1} parent=1 // loop_exit
      _
    %300 = vsyncpa [#allocation3], 1
    %s301 = scalar_lea.sflag [#allocation3], 1
    %302 = vsyncpa %s301, 1

</llo_original>
